<compile_context>
chip_gen: v6e
topology: v6e:2x2x1
jax: 0.10.0
libtpu: 0.0.40
codegen_flags: <defaults>
</compile_context>

<pallas_src>
import jax
import jax.numpy as jnp
from jax.experimental import pallas as pl
from jax.experimental.pallas import tpu as pltpu

EPS = 1e-5
LANE = 128


def mlp_kernel(x_ref,
               w1_ref, b1_ref,
               w2_ref, b2_ref,
               w3_ref, b3_ref,
               w4_ref, b4_ref,
               o_ref):
    # Feature-major: batch lives on the lane axis; every intermediate
    # (64|32|10|2, TB) and the output block (2, TB) are lane-dense.
    x = x_ref[...].astype(w1_ref.dtype)            # per-tile cast (free VPU filler)

    # h1 = W1^T @ x^T via dot_general contracting the feature axes of both
    # operands (no explicit transpose needed): (64, F) x (TB, F) -> (64, TB).
    h = jax.lax.dot_general(w1_ref[...], x, (((1,), (1,)), ((), ())),
                            preferred_element_type=jnp.float32)
    h = jnp.maximum(h + b1_ref[...], 0.0)          # BN folded; dropout = id (eval)

    def layer(w_ref, b_ref, h, relu):
        y = jnp.dot(w_ref[...], h.astype(w_ref.dtype),
                    preferred_element_type=jnp.float32) + b_ref[...]
        return jnp.maximum(y, 0.0) if relu else y

    h = layer(w2_ref, b2_ref, h, True)             # (32, TB)
    h = layer(w3_ref, b3_ref, h, True)             # (10, TB)
    o_ref[...] = layer(w4_ref, b4_ref, h, False).astype(o_ref.dtype)   # (2, TB)


def _round_up(n, m):
    return (n + m - 1) // m * m


def _choose_tiling(B, tb, row_align):
    """Pick (TB, steps) minimizing batch padding.

    Multi-step grids need TB % 128 == 0 (TB is the lane axis of the output
    block); a single-step grid only needs sublane alignment since the block
    then equals the full (padded) array.
    """
    steps = pl.cdiv(B, tb)
    if steps == 1 and B >= 1024:
        steps = 2                       # >=2 tiles so v7x megacore can split
    if steps == 1:
        return _round_up(B, row_align), 1
    TB = _round_up(pl.cdiv(B, steps), LANE)
    steps = pl.cdiv(B, TB)
    return TB, steps


def init_params(key, input_shape):
    """Deterministic init mirroring PyTorch Linear defaults; BN buffers are
    given non-trivial values so the eval-mode BN fold is actually exercised."""
    dims = [(input_shape, 64), (64, 32), (32, 10), (10, 2)]
    params = []
    for fan_in, fan_out in dims:
        key, kw, kb = jax.random.split(key, 3)
        bound = 1.0 / (fan_in ** 0.5)
        w = jax.random.uniform(kw, (fan_in, fan_out), jnp.float32, -bound, bound)
        b = jax.random.uniform(kb, (1, fan_out), jnp.float32, -bound, bound)
        params.append((w, b))
    bn = []
    for c in (64, 32, 10):
        key, k1, k2, k3, k4 = jax.random.split(key, 5)
        gamma = 1.0 + 0.1 * jax.random.normal(k1, (1, c), jnp.float32)
        beta = 0.1 * jax.random.normal(k2, (1, c), jnp.float32)
        mean = 0.1 * jax.random.normal(k3, (1, c), jnp.float32)
        var = 1.0 + 0.2 * jax.random.uniform(k4, (1, c), jnp.float32)
        bn.append((gamma, beta, mean, var))
    return params, bn


def fold_bn(params, bn):
    """Fold eval-mode BN into the preceding Linear (exact in eval mode):
    w' = w * (gamma * rsqrt(var+eps)), b' = (b - mean) * scale + beta."""
    (w1, b1), (w2, b2), (w3, b3), (w4, b4) = params
    folded = []
    for (w, b), (g, be, m, v) in zip([(w1, b1), (w2, b2), (w3, b3)], bn):
        scale = g * jax.lax.rsqrt(v + EPS)          # (1, out)
        folded.append((w * scale, (b - m) * scale + be))
    folded.append((w4, b4))
    return folded


def mlp_forward(x, params, bn, *, compute_dtype=jnp.float32, tb=8192):
    """Pallas forward.  1-D grid over the batch; folded weights resident in
    VMEM (constant index maps); feature-major compute for lane-dense tiles."""
    folded = fold_bn(params, bn)
    B, F = x.shape

    row_align = 16 if compute_dtype == jnp.bfloat16 else 8
    TB, steps = _choose_tiling(B, tb, row_align)
    Bp = TB * steps
    if Bp != B:
        x = jnp.pad(x, ((0, Bp - B), (0, 0)))
    # NOTE: x stays f32 in HBM (no wrapper-side cast pass); cast is in-kernel.

    flat = []
    for w, b in folded:
        flat.append(jnp.asarray(w.T, compute_dtype))             # (out, in)
        flat.append(jnp.asarray(b.reshape(-1, 1), jnp.float32))  # (out, 1), f32 add

    def const_spec(a):
        return pl.BlockSpec(a.shape, lambda i: (0, 0))

    in_specs = [pl.BlockSpec((TB, F), lambda i: (i, 0))]
    in_specs += [const_spec(a) for a in flat]

    out_t = pl.pallas_call(
        mlp_kernel,
        out_shape=jax.ShapeDtypeStruct((2, Bp), jnp.float32),    # lane-dense logits
        grid_spec=pltpu.PrefetchScalarGridSpec(
            num_scalar_prefetch=0,
            grid=(steps,),
            in_specs=in_specs,
            out_specs=pl.BlockSpec((2, TB), lambda i: (0, i)),
        ),
        compiler_params=pltpu.CompilerParams(
            dimension_semantics=("parallel",),        # megacore split on v7x
            vmem_limit_bytes=48 * 1024 * 1024),       # headroom for big TB; < v7x 64MiB
    )(x, *flat)

    return out_t[:, :B].T    # tiny (2, B) -> (B, 2)


def mlp_reference(x, params, bn):
    """Pure-JAX reference (unfolded BN, eval mode) for sanity checking."""
    (w1, b1), (w2, b2), (w3, b3), (w4, b4) = params
    h = x
    for (w, b), (g, be, m, v) in zip([(w1, b1), (w2, b2), (w3, b3)], bn):
        h = h @ w + b
        h = (h - m) * jax.lax.rsqrt(v + EPS) * g + be
        h = jnp.maximum(h, 0.0)
    return h @ w4 + b4


if __name__ == "__main__":
    input_shape = 32  # feature dimension of the MLP

    key = jax.random.PRNGKey(0)
    kx, kp, kx2 = jax.random.split(key, 3)
    params, bn = init_params(kp, input_shape)

    # Small batch: single grid step, block == full padded array.
    batch = 8
    x = jax.random.normal(kx, (batch, input_shape), dtype=jnp.float32)
    ref = mlp_reference(x, params, bn)

    out = jax.block_until_ready(mlp_forward(x, params, bn,
                                            compute_dtype=jnp.float32))
    assert out.shape == (batch, 2)
    assert jnp.allclose(out, ref, atol=1e-4, rtol=1e-4)

    # bf16 weight path (f32 MXU accumulation, x cast in-kernel).
    out_bf16 = jax.block_until_ready(mlp_forward(x, params, bn,
                                                 compute_dtype=jnp.bfloat16))
    assert out_bf16.shape == (batch, 2)
    assert jnp.allclose(out_bf16, ref, atol=1e-1, rtol=1e-1)

    # Multi-step grid with padding-aware tiling (exercises the 128-aligned
    # lane-dense output path and the "parallel" batch axis).
    batch2 = 300
    x2 = jax.random.normal(kx2, (batch2, input_shape), dtype=jnp.float32)
    ref2 = mlp_reference(x2, params, bn)
    out2 = jax.block_until_ready(mlp_forward(x2, params, bn,
                                             compute_dtype=jnp.float32, tb=128))
    assert out2.shape == (batch2, 2)
    assert jnp.allclose(out2, ref2, atol=1e-4, rtol=1e-4)

    print("KERNEL_OK")
</pallas_src>

<mosaic_0001>
module attributes {stable_mosaic.version = 11 : i64} {
  func.func @mlp_kernel(%arg0: i32, %arg1: memref<8x32xf32, #tpu.memory_space<vmem>>, %arg2: memref<64x32xf32, #tpu.memory_space<vmem>>, %arg3: memref<64x1xf32, #tpu.memory_space<vmem>>, %arg4: memref<32x64xf32, #tpu.memory_space<vmem>>, %arg5: memref<32x1xf32, #tpu.memory_space<vmem>>, %arg6: memref<10x32xf32, #tpu.memory_space<vmem>>, %arg7: memref<10x1xf32, #tpu.memory_space<vmem>>, %arg8: memref<2x10xf32, #tpu.memory_space<vmem>>, %arg9: memref<2x1xf32, #tpu.memory_space<vmem>>, %arg10: memref<2x8xf32, #tpu.memory_space<vmem>>) attributes {dimension_semantics = [#tpu.dimension_semantics<parallel>], iteration_bounds = array<i64: 1>, scalar_prefetch = 0 : i64, scratch_operands = 0 : i64, tpu.core_type = #tpu.core_type<tc>, window_params = [{transform_indices = @transform_0, window_bounds = array<i64: 8, 32>}, {pipeline_mode = #tpu.pipeline_mode<synchronous>, transform_indices = @transform_1, window_bounds = array<i64: 64, 32>}, {pipeline_mode = #tpu.pipeline_mode<synchronous>, transform_indices = @transform_2, window_bounds = array<i64: 64, 1>}, {pipeline_mode = #tpu.pipeline_mode<synchronous>, transform_indices = @transform_3, window_bounds = array<i64: 32, 64>}, {pipeline_mode = #tpu.pipeline_mode<synchronous>, transform_indices = @transform_4, window_bounds = array<i64: 32, 1>}, {pipeline_mode = #tpu.pipeline_mode<synchronous>, transform_indices = @transform_5, window_bounds = array<i64: 10, 32>}, {pipeline_mode = #tpu.pipeline_mode<synchronous>, transform_indices = @transform_6, window_bounds = array<i64: 10, 1>}, {pipeline_mode = #tpu.pipeline_mode<synchronous>, transform_indices = @transform_7, window_bounds = array<i64: 2, 10>}, {pipeline_mode = #tpu.pipeline_mode<synchronous>, transform_indices = @transform_8, window_bounds = array<i64: 2, 1>}, {transform_indices = @transform_9, window_bounds = array<i64: 2, 8>}]} {
    %c0 = arith.constant 0 : index
    %c0_0 = arith.constant 0 : index
    %0 = vector.load %arg1[%c0, %c0_0] : memref<8x32xf32, #tpu.memory_space<vmem>>, vector<8x32xf32>
    %c0_1 = arith.constant 0 : index
    %c0_2 = arith.constant 0 : index
    %1 = vector.load %arg2[%c0_1, %c0_2] : memref<64x32xf32, #tpu.memory_space<vmem>>, vector<64x32xf32>
    %cst = arith.constant dense<0.000000e+00> : vector<64x8xf32>
    %2 = tpu.matmul %1, %0, %cst {dimension_numbers = #tpu.dot_dimension_numbers<[1], [1], [0], [0], [0, 0, 1, 0], [], []>} : vector<64x32xf32>, vector<8x32xf32>, vector<64x8xf32> -> vector<64x8xf32>
    %c0_3 = arith.constant 0 : index
    %c0_4 = arith.constant 0 : index
    %3 = vector.load %arg3[%c0_3, %c0_4] : memref<64x1xf32, #tpu.memory_space<vmem>>, vector<64x1xf32>
    %4 = vector.broadcast %3 : vector<64x1xf32> to vector<64x8xf32>
    %5 = arith.addf %2, %4 : vector<64x8xf32>
    %cst_5 = arith.constant 0.000000e+00 : f32
    %6 = vector.broadcast %cst_5 : f32 to vector<64x8xf32>
    %7 = arith.maximumf %5, %6 : vector<64x8xf32>
    %c0_6 = arith.constant 0 : index
    %c0_7 = arith.constant 0 : index
    %8 = vector.load %arg4[%c0_6, %c0_7] : memref<32x64xf32, #tpu.memory_space<vmem>>, vector<32x64xf32>
    %cst_8 = arith.constant dense<0.000000e+00> : vector<32x8xf32>
    %9 = tpu.matmul %8, %7, %cst_8 {dimension_numbers = #tpu.dot_dimension_numbers<[1], [0], [0], [1], [0, 0, 1, 1], [], []>} : vector<32x64xf32>, vector<64x8xf32>, vector<32x8xf32> -> vector<32x8xf32>
    %c0_9 = arith.constant 0 : index
    %c0_10 = arith.constant 0 : index
    %10 = vector.load %arg5[%c0_9, %c0_10] : memref<32x1xf32, #tpu.memory_space<vmem>>, vector<32x1xf32>
    %11 = vector.broadcast %10 : vector<32x1xf32> to vector<32x8xf32>
    %12 = arith.addf %9, %11 : vector<32x8xf32>
    %cst_11 = arith.constant 0.000000e+00 : f32
    %13 = vector.broadcast %cst_11 : f32 to vector<32x8xf32>
    %14 = arith.maximumf %12, %13 : vector<32x8xf32>
    %c0_12 = arith.constant 0 : index
    %c0_13 = arith.constant 0 : index
    %15 = vector.load %arg6[%c0_12, %c0_13] : memref<10x32xf32, #tpu.memory_space<vmem>>, vector<10x32xf32>
    %cst_14 = arith.constant dense<0.000000e+00> : vector<10x8xf32>
    %16 = tpu.matmul %15, %14, %cst_14 {dimension_numbers = #tpu.dot_dimension_numbers<[1], [0], [0], [1], [0, 0, 1, 1], [], []>} : vector<10x32xf32>, vector<32x8xf32>, vector<10x8xf32> -> vector<10x8xf32>
    %c0_15 = arith.constant 0 : index
    %c0_16 = arith.constant 0 : index
    %17 = vector.load %arg7[%c0_15, %c0_16] : memref<10x1xf32, #tpu.memory_space<vmem>>, vector<10x1xf32>
    %18 = vector.broadcast %17 : vector<10x1xf32> to vector<10x8xf32>
    %19 = arith.addf %16, %18 : vector<10x8xf32>
    %cst_17 = arith.constant 0.000000e+00 : f32
    %20 = vector.broadcast %cst_17 : f32 to vector<10x8xf32>
    %21 = arith.maximumf %19, %20 : vector<10x8xf32>
    %c0_18 = arith.constant 0 : index
    %c0_19 = arith.constant 0 : index
    %22 = vector.load %arg8[%c0_18, %c0_19] : memref<2x10xf32, #tpu.memory_space<vmem>>, vector<2x10xf32>
    %cst_20 = arith.constant dense<0.000000e+00> : vector<2x8xf32>
    %23 = tpu.matmul %22, %21, %cst_20 {dimension_numbers = #tpu.dot_dimension_numbers<[1], [0], [0], [1], [0, 0, 1, 1], [], []>} : vector<2x10xf32>, vector<10x8xf32>, vector<2x8xf32> -> vector<2x8xf32>
    %c0_21 = arith.constant 0 : index
    %c0_22 = arith.constant 0 : index
    %24 = vector.load %arg9[%c0_21, %c0_22] : memref<2x1xf32, #tpu.memory_space<vmem>>, vector<2x1xf32>
    %25 = vector.broadcast %24 : vector<2x1xf32> to vector<2x8xf32>
    %26 = arith.addf %23, %25 : vector<2x8xf32>
    %c0_23 = arith.constant 0 : index
    %c0_24 = arith.constant 0 : index
    %27 = vector.load %arg10[%c0_23, %c0_24] : memref<2x8xf32, #tpu.memory_space<vmem>>, vector<2x8xf32>
    tpu.vector_store %arg10[%c0_23, %c0_24], %26 {strides = array<i32>} : memref<2x8xf32, #tpu.memory_space<vmem>>, vector<2x8xf32>,
    return
  }
  func.func @transform_0(%arg0: i32) -> (i32, i32) {
    %c0_i32 = arith.constant 0 : i32
    %c0_i32_0 = arith.constant 0 : i32
    return %arg0, %c0_i32 : i32, i32
  }
  func.func @transform_1(%arg0: i32) -> (i32, i32) {
    %c0_i32 = arith.constant 0 : i32
    %c0_i32_0 = arith.constant 0 : i32
    %c0_i32_1 = arith.constant 0 : i32
    return %c0_i32, %c0_i32_0 : i32, i32
  }
  func.func @transform_2(%arg0: i32) -> (i32, i32) {
    %c0_i32 = arith.constant 0 : i32
    %c0_i32_0 = arith.constant 0 : i32
    %c0_i32_1 = arith.constant 0 : i32
    return %c0_i32, %c0_i32_0 : i32, i32
  }
  func.func @transform_3(%arg0: i32) -> (i32, i32) {
    %c0_i32 = arith.constant 0 : i32
    %c0_i32_0 = arith.constant 0 : i32
    %c0_i32_1 = arith.constant 0 : i32
    return %c0_i32, %c0_i32_0 : i32, i32
  }
  func.func @transform_4(%arg0: i32) -> (i32, i32) {
    %c0_i32 = arith.constant 0 : i32
    %c0_i32_0 = arith.constant 0 : i32
    %c0_i32_1 = arith.constant 0 : i32
    return %c0_i32, %c0_i32_0 : i32, i32
  }
  func.func @transform_5(%arg0: i32) -> (i32, i32) {
    %c0_i32 = arith.constant 0 : i32
    %c0_i32_0 = arith.constant 0 : i32
    %c0_i32_1 = arith.constant 0 : i32
    return %c0_i32, %c0_i32_0 : i32, i32
  }
  func.func @transform_6(%arg0: i32) -> (i32, i32) {
    %c0_i32 = arith.constant 0 : i32
    %c0_i32_0 = arith.constant 0 : i32
    %c0_i32_1 = arith.constant 0 : i32
    return %c0_i32, %c0_i32_0 : i32, i32
  }
  func.func @transform_7(%arg0: i32) -> (i32, i32) {
    %c0_i32 = arith.constant 0 : i32
    %c0_i32_0 = arith.constant 0 : i32
    %c0_i32_1 = arith.constant 0 : i32
    return %c0_i32, %c0_i32_0 : i32, i32
  }
  func.func @transform_8(%arg0: i32) -> (i32, i32) {
    %c0_i32 = arith.constant 0 : i32
    %c0_i32_0 = arith.constant 0 : i32
    %c0_i32_1 = arith.constant 0 : i32
    return %c0_i32, %c0_i32_0 : i32, i32
  }
  func.func @transform_9(%arg0: i32) -> (i32, i32) {
    %c0_i32 = arith.constant 0 : i32
    %c0_i32_0 = arith.constant 0 : i32
    return %c0_i32, %arg0 : i32, i32
  }
}

</mosaic_0001>

<llo_original>
// kernel: tpu_custom_call.1
$region0: #{tpu_custom_call.1}
  #allocation0 [shape = 'u32[]', space=smem, size = 0x4, offset = 0x4, fixed_abs, tag = 'smem constant byte address 0x4 - core index']
  #allocation1 [shape = 'u32[144,128]{1,0:T(1,128)}', space=vmem, size = 0x12000, scoped, tag = 'internal scratch']
  %s0 = inlined_call_operand.vmem [shape: f32[8,32], index: 0, kind: input, shape index: {}]
  %s1 = inlined_call_operand.vmem [shape: f32[64,32], index: 1, kind: input, shape index: {}]
  %s2 = inlined_call_operand.vmem [shape: f32[64,1], index: 2, kind: input, shape index: {}]
  %s3 = inlined_call_operand.vmem [shape: f32[32,64], index: 3, kind: input, shape index: {}]
  %s4 = inlined_call_operand.vmem [shape: f32[32,1], index: 4, kind: input, shape index: {}]
  %s5 = inlined_call_operand.vmem [shape: f32[10,32], index: 5, kind: input, shape index: {}]
  %s6 = inlined_call_operand.vmem [shape: f32[10,1], index: 6, kind: input, shape index: {}]
  %s7 = inlined_call_operand.vmem [shape: f32[2,10], index: 7, kind: input, shape index: {}]
  %s8 = inlined_call_operand.vmem [shape: f32[2,1], index: 8, kind: input, shape index: {}]
  %s9 = inlined_call_operand.hbm [shape: f32[2,8], index: 9, kind: output, shape index: {}]
  %s10 = sld [smem:[#allocation0]]
  $region46: #{tpu_custom_call.1} parent=0
    _
  %s12 = ssub.s32 1, %s10
  %s13 = scalar_select 0, %s12, %s10
  $region1: #{tpu_custom_call.1} parent=0
    #allocation2 [shape = 'u8[1024]{0}', space=vmem, size = 0x400, scoped, tag = 'output window, operand 0, single buffered']
    #allocation3 [shape = 's32[1]{0}', space=sflag, size = 0x4, scoped, tag = 'scoped memory for tpu_custom_call.1']
    %14 = vsyncpa [#allocation3], 0
    // Predicated region
    $region2: #{tpu_custom_call.1} parent=1 // pred_check
      _
    $region3: #{tpu_custom_call.1} parent=1 // pred_check_branch
      %16 = sbr.rel (0) target = $region5
    $region4: #{tpu_custom_call.1} parent=1 // pred_region
      _
    $region5: #{tpu_custom_call.1} parent=1 // pred_fallthru
      _
    // Predicated region
    $region6: #{tpu_custom_call.1} parent=1 // pred_check
      _
    $region7: #{tpu_custom_call.1} parent=1 // pred_check_branch
      %18 = sbr.rel (0) target = $region9
    $region8: #{tpu_custom_call.1} parent=1 // pred_region
      _
    $region9: #{tpu_custom_call.1} parent=1 // pred_fallthru
      _
    // Predicated region
    $region10: #{tpu_custom_call.1} parent=1 // pred_check
      _
    $region11: #{tpu_custom_call.1} parent=1 // pred_check_branch
      %20 = sbr.rel (0) target = $region13
    $region12: #{tpu_custom_call.1} parent=1 // pred_region
      _
    $region13: #{tpu_custom_call.1} parent=1 // pred_fallthru
      _
    // Predicated region
    $region14: #{tpu_custom_call.1} parent=1 // pred_check
      _
    $region15: #{tpu_custom_call.1} parent=1 // pred_check_branch
      %22 = sbr.rel (0) target = $region17
    $region16: #{tpu_custom_call.1} parent=1 // pred_region
      _
    $region17: #{tpu_custom_call.1} parent=1 // pred_fallthru
      _
    // Predicated region
    $region18: #{tpu_custom_call.1} parent=1 // pred_check
      _
    $region19: #{tpu_custom_call.1} parent=1 // pred_check_branch
      %24 = sbr.rel (0) target = $region21
    $region20: #{tpu_custom_call.1} parent=1 // pred_region
      _
    $region21: #{tpu_custom_call.1} parent=1 // pred_fallthru
      _
    // Predicated region
    $region22: #{tpu_custom_call.1} parent=1 // pred_check
      _
    $region23: #{tpu_custom_call.1} parent=1 // pred_check_branch
      %26 = sbr.rel (0) target = $region25
    $region24: #{tpu_custom_call.1} parent=1 // pred_region
      _
    $region25: #{tpu_custom_call.1} parent=1 // pred_fallthru
      _
    // Predicated region
    $region26: #{tpu_custom_call.1} parent=1 // pred_check
      _
    $region27: #{tpu_custom_call.1} parent=1 // pred_check_branch
      %28 = sbr.rel (0) target = $region29
    $region28: #{tpu_custom_call.1} parent=1 // pred_region
      _
    $region29: #{tpu_custom_call.1} parent=1 // pred_fallthru
      _
    // Predicated region
    $region30: #{tpu_custom_call.1} parent=1 // pred_check
      _
    $region31: #{tpu_custom_call.1} parent=1 // pred_check_branch
      %30 = sbr.rel (0) target = $region33
    $region32: #{tpu_custom_call.1} parent=1 // pred_region
      _
    $region33: #{tpu_custom_call.1} parent=1 // pred_fallthru
      _
    // Predicated region
    $region34: #{tpu_custom_call.1} parent=1 // pred_check
      _
    $region35: #{tpu_custom_call.1} parent=1 // pred_check_branch
      %32 = sbr.rel (0) target = $region37
    $region36: #{tpu_custom_call.1} parent=1 // pred_region
      _
    $region37: #{tpu_custom_call.1} parent=1 // pred_fallthru
      _
    %v33 = vld [vmem:[%s0] sm:$0xff]
    %v34 = vld [vmem:[%s1] sm:$0xff]
    %v35 = vld [vmem:[%s1 + $0x8] sm:$0xff]
    %v36 = vld [vmem:[%s1 + $0x10] sm:$0xff]
    %v37 = vld [vmem:[%s1 + $0x18] sm:$0xff]
    %v38 = vld [vmem:[%s1 + $0x20] sm:$0xff]
    %v39 = vld [vmem:[%s1 + $0x28] sm:$0xff]
    %v40 = vld [vmem:[%s1 + $0x30] sm:$0xff]
    %v41 = vld [vmem:[%s1 + $0x38] sm:$0xff]
    %v42 = vld [vmem:[%s2] sm:$0xff]
    %v43 = vld [vmem:[%s2 + $0x8] sm:$0xff]
    %v44 = vld [vmem:[%s2 + $0x10] sm:$0xff]
    %v45 = vld [vmem:[%s2 + $0x18] sm:$0xff]
    %v46 = vld [vmem:[%s2 + $0x20] sm:$0xff]
    %v47 = vld [vmem:[%s2 + $0x28] sm:$0xff]
    %v48 = vld [vmem:[%s2 + $0x30] sm:$0xff]
    %v49 = vld [vmem:[%s2 + $0x38] sm:$0xff]
    %51 = vset.pattern.permute.xlu0 0
    %52 = vperm.xlu0 %51, %v42
    %v53 = vpop.permute.xlu0 %52
    %56 = vset.pattern.permute.xlu0 0
    %57 = vperm.xlu0 %56, %v43
    %v58 = vpop.permute.xlu0 %57
    %61 = vset.pattern.permute.xlu0 0
    %62 = vperm.xlu0 %61, %v44
    %v63 = vpop.permute.xlu0 %62
    %66 = vset.pattern.permute.xlu0 0
    %67 = vperm.xlu0 %66, %v45
    %v68 = vpop.permute.xlu0 %67
    %71 = vset.pattern.permute.xlu0 0
    %72 = vperm.xlu0 %71, %v46
    %v73 = vpop.permute.xlu0 %72
    %76 = vset.pattern.permute.xlu0 0
    %77 = vperm.xlu0 %76, %v47
    %v78 = vpop.permute.xlu0 %77
    %81 = vset.pattern.permute.xlu0 0
    %82 = vperm.xlu0 %81, %v48
    %v83 = vpop.permute.xlu0 %82
    %86 = vset.pattern.permute.xlu0 0
    %87 = vperm.xlu0 %86, %v49
    %v88 = vpop.permute.xlu0 %87
    %vm90 = vcmask 261120
    %v92 = vsel %vm90, %v34, 0
    %v95 = vsel %vm90, %v35, 0
    %v98 = vsel %vm90, %v36, 0
    %v101 = vsel %vm90, %v37, 0
    %v104 = vsel %vm90, %v38, 0
    %v107 = vsel %vm90, %v39, 0
    %v110 = vsel %vm90, %v40, 0
    %v113 = vsel %vm90, %v41, 0
    %v116 = vsel %vm90, %v33, 0
    %118 = vmatprep.subr.mxu0 0.0
    %119 = vmatpush1.xpose.msra.mxu0 0.0
    %120 = vmatprep.subr.mxu0 0.0
    %121 = vmatpush1.xpose.msra.mxu0 0.0
    %122 = vmatprep.subr.mxu0 0.0
    %123 = vmatpush1.xpose.msra.mxu0 0.0
    %124 = vmatprep.subr.mxu0 0.0
    %125 = vmatpush1.xpose.msra.mxu0 0.0
    %126 = vmatprep.subr.mxu0 0.0
    %127 = vmatpush1.xpose.msra.mxu0 0.0
    %128 = vmatprep.subr.mxu0 0.0
    %129 = vmatpush1.xpose.msra.mxu0 0.0
    %130 = vmatprep.subr.mxu0 0.0
    %131 = vmatpush1.xpose.msra.mxu0 0.0
    %132 = vmatprep.subr.mxu0 0.0
    %133 = vmatpush1.xpose.msra.mxu0 0.0
    %134 = vmatprep.subr.mxu0 0.0
    %135 = vmatpush1.xpose.msra.mxu0 0.0
    %136 = vmatprep.subr.mxu0 0.0
    %137 = vmatpush1.xpose.msra.mxu0 0.0
    %138 = vmatprep.subr.mxu0 0.0
    %139 = vmatpush1.xpose.msra.mxu0 0.0
    %140 = vmatprep.subr.mxu0 0.0
    %141 = vmatpush1.xpose.msra.mxu0 0.0
    %142 = vmatprep.subr.mxu0 0.0
    %143 = vmatpush1.xpose.msra.mxu0 0.0
    %144 = vmatprep.subr.mxu0 0.0
    %145 = vmatpush1.xpose.msra.mxu0 0.0
    %146 = vmatprep.subr.mxu0 0.0
    %147 = vmatpush1.xpose.msra.mxu0 0.0
    %148 = vmatprep.subr.mxu0 0.0
    %149 = vmatpush1.xpose.msra.mxu0 %v116
    %150 = vmatprep.subr.mxu0 0.0
    %151 = vmatpush2.xpose.msra.mxu0 0.0
    %152 = vmatprep.subr.mxu0 0.0
    %153 = vmatpush2.xpose.msra.mxu0 0.0
    %154 = vmatprep.subr.mxu0 0.0
    %155 = vmatpush2.xpose.msra.mxu0 0.0
    %156 = vmatprep.subr.mxu0 0.0
    %157 = vmatpush2.xpose.msra.mxu0 0.0
    %158 = vmatprep.subr.mxu0 0.0
    %159 = vmatpush2.xpose.msra.mxu0 0.0
    %160 = vmatprep.subr.mxu0 0.0
    %161 = vmatpush2.xpose.msra.mxu0 0.0
    %162 = vmatprep.subr.mxu0 0.0
    %163 = vmatpush2.xpose.msra.mxu0 0.0
    %164 = vmatprep.subr.mxu0 0.0
    %165 = vmatpush2.xpose.msra.mxu0 0.0
    %166 = vmatprep.subr.mxu0 0.0
    %167 = vmatpush2.xpose.msra.mxu0 0.0
    %168 = vmatprep.subr.mxu0 0.0
    %169 = vmatpush2.xpose.msra.mxu0 0.0
    %170 = vmatprep.subr.mxu0 0.0
    %171 = vmatpush2.xpose.msra.mxu0 0.0
    %172 = vmatprep.subr.mxu0 0.0
    %173 = vmatpush2.xpose.msra.mxu0 0.0
    %174 = vmatprep.subr.mxu0 0.0
    %175 = vmatpush2.xpose.msra.mxu0 0.0
    %176 = vmatprep.subr.mxu0 0.0
    %177 = vmatpush2.xpose.msra.mxu0 0.0
    %178 = vmatprep.subr.mxu0 0.0
    %179 = vmatpush2.xpose.msra.mxu0 0.0
    %180 = vmatprep.subr.mxu0 0.0
    %181 = vmatpush2.xpose.msra.mxu0 0.0
    %182 = vmatprep.mubr.f32.mxu0 0.0
    %183 = vmatmul.mubr.f32.gmra.mxu0 %v92
    %v184 = vpop.f32.mrf.mxu0
    %v185 = vadd.f32 %v53, %v184
    %v186 = vpop.f32.mrf.mxu0
    %187 = vmatprep.mubr.f32.mxu0 0.0
    %188 = vmatmul.mubr.f32.gmra.mxu0 %v95
    %v189 = vpop.f32.mrf.mxu0
    %v190 = vadd.f32 %v58, %v189
    %v191 = vpop.f32.mrf.mxu0
    %192 = vmatprep.mubr.f32.mxu0 0.0
    %193 = vmatmul.mubr.f32.gmra.mxu0 %v98
    %v194 = vpop.f32.mrf.mxu0
    %v195 = vadd.f32 %v63, %v194
    %v196 = vpop.f32.mrf.mxu0
    %197 = vmatprep.mubr.f32.mxu0 0.0
    %198 = vmatmul.mubr.f32.gmra.mxu0 %v101
    %v199 = vpop.f32.mrf.mxu0
    %v200 = vadd.f32 %v68, %v199
    %v201 = vpop.f32.mrf.mxu0
    %202 = vmatprep.mubr.f32.mxu0 0.0
    %203 = vmatmul.mubr.f32.gmra.mxu0 %v104
    %v204 = vpop.f32.mrf.mxu0
    %v205 = vadd.f32 %v73, %v204
    %v206 = vpop.f32.mrf.mxu0
    %207 = vmatprep.mubr.f32.mxu0 0.0
    %208 = vmatmul.mubr.f32.gmra.mxu0 %v107
    %v209 = vpop.f32.mrf.mxu0
    %v210 = vadd.f32 %v78, %v209
    %v211 = vpop.f32.mrf.mxu0
    %212 = vmatprep.mubr.f32.mxu0 0.0
    %213 = vmatmul.mubr.f32.gmra.mxu0 %v110
    %v214 = vpop.f32.mrf.mxu0
    %v215 = vadd.f32 %v83, %v214
    %v216 = vpop.f32.mrf.mxu0
    %217 = vmatprep.mubr.f32.mxu0 0.0
    %218 = vmatmul.mubr.f32.gmra.mxu0 %v113
    %v219 = vpop.f32.mrf.mxu0
    %v220 = vadd.f32 %v88, %v219
    %v221 = vpop.f32.mrf.mxu0
    %222 = vdwg.mxu0
    %v223 = vmax.f32 %v185, 0.0
    %v224 = vmax.f32 %v190, 0.0
    %v225 = vmax.f32 %v195, 0.0
    %v226 = vmax.f32 %v200, 0.0
    %v227 = vmax.f32 %v205, 0.0
    %v228 = vmax.f32 %v210, 0.0
    %v229 = vmax.f32 %v215, 0.0
    %v230 = vmax.f32 %v220, 0.0
    %v231 = vld [vmem:[%s3] sm:$0xff]
    %v232 = vld [vmem:[%s3 + $0x8] sm:$0xff]
    %v233 = vld [vmem:[%s3 + $0x10] sm:$0xff]
    %v234 = vld [vmem:[%s3 + $0x18] sm:$0xff]
    %v235 = vld [vmem:[%s4] sm:$0xff]
    %v236 = vld [vmem:[%s4 + $0x8] sm:$0xff]
    %v237 = vld [vmem:[%s4 + $0x10] sm:$0xff]
    %v238 = vld [vmem:[%s4 + $0x18] sm:$0xff]
    %240 = vset.pattern.permute.xlu0 0
    %241 = vperm.xlu0 %240, %v235
    %v242 = vpop.permute.xlu0 %241
    %245 = vset.pattern.permute.xlu0 0
    %246 = vperm.xlu0 %245, %v236
    %v247 = vpop.permute.xlu0 %246
    %250 = vset.pattern.permute.xlu0 0
    %251 = vperm.xlu0 %250, %v237
    %v252 = vpop.permute.xlu0 %251
    %255 = vset.pattern.permute.xlu0 0
    %256 = vperm.xlu0 %255, %v238
    %v257 = vpop.permute.xlu0 %256
    %vm259 = vcmask 523264
    %v261 = vsel %vm259, %v231, 0
    %v264 = vsel %vm259, %v232, 0
    %v267 = vsel %vm259, %v233, 0
    %v270 = vsel %vm259, %v234, 0
    %272 = vmatprep.subr.mxu0 0.0
    %273 = vmatpush1.msra.mxu0 0.0
    %274 = vmatprep.subr.mxu0 0.0
    %275 = vmatpush1.msra.mxu0 0.0
    %276 = vmatprep.subr.mxu0 0.0
    %277 = vmatpush1.msra.mxu0 0.0
    %278 = vmatprep.subr.mxu0 0.0
    %279 = vmatpush1.msra.mxu0 0.0
    %280 = vmatprep.subr.mxu0 0.0
    %281 = vmatpush1.msra.mxu0 0.0
    %282 = vmatprep.subr.mxu0 0.0
    %283 = vmatpush1.msra.mxu0 0.0
    %284 = vmatprep.subr.mxu0 0.0
    %285 = vmatpush1.msra.mxu0 0.0
    %286 = vmatprep.subr.mxu0 0.0
    %287 = vmatpush1.msra.mxu0 0.0
    %288 = vmatprep.subr.mxu0 0.0
    %289 = vmatpush1.msra.mxu0 %v230
    %290 = vmatprep.subr.mxu0 0.0
    %291 = vmatpush1.msra.mxu0 %v229
    %292 = vmatprep.subr.mxu0 0.0
    %293 = vmatpush1.msra.mxu0 %v228
    %294 = vmatprep.subr.mxu0 0.0
    %295 = vmatpush1.msra.mxu0 %v227
    %296 = vmatprep.subr.mxu0 0.0
    %297 = vmatpush1.msra.mxu0 %v226
    %298 = vmatprep.subr.mxu0 0.0
    %299 = vmatpush1.msra.mxu0 %v225
    %300 = vmatprep.subr.mxu0 0.0
    %301 = vmatpush1.msra.mxu0 %v224
    %302 = vmatprep.subr.mxu0 0.0
    %303 = vmatpush1.msra.mxu0 %v223
    %304 = vmatprep.subr.mxu0 0.0
    %305 = vmatpush2.msra.mxu0 0.0
    %306 = vmatprep.subr.mxu0 0.0
    %307 = vmatpush2.msra.mxu0 0.0
    %308 = vmatprep.subr.mxu0 0.0
    %309 = vmatpush2.msra.mxu0 0.0
    %310 = vmatprep.subr.mxu0 0.0
    %311 = vmatpush2.msra.mxu0 0.0
    %312 = vmatprep.subr.mxu0 0.0
    %313 = vmatpush2.msra.mxu0 0.0
    %314 = vmatprep.subr.mxu0 0.0
    %315 = vmatpush2.msra.mxu0 0.0
    %316 = vmatprep.subr.mxu0 0.0
    %317 = vmatpush2.msra.mxu0 0.0
    %318 = vmatprep.subr.mxu0 0.0
    %319 = vmatpush2.msra.mxu0 0.0
    %320 = vmatprep.subr.mxu0 0.0
    %321 = vmatpush2.msra.mxu0 0.0
    %322 = vmatprep.subr.mxu0 0.0
    %323 = vmatpush2.msra.mxu0 0.0
    %324 = vmatprep.subr.mxu0 0.0
    %325 = vmatpush2.msra.mxu0 0.0
    %326 = vmatprep.subr.mxu0 0.0
    %327 = vmatpush2.msra.mxu0 0.0
    %328 = vmatprep.subr.mxu0 0.0
    %329 = vmatpush2.msra.mxu0 0.0
    %330 = vmatprep.subr.mxu0 0.0
    %331 = vmatpush2.msra.mxu0 0.0
    %332 = vmatprep.subr.mxu0 0.0
    %333 = vmatpush2.msra.mxu0 0.0
    %334 = vmatprep.subr.mxu0 0.0
    %335 = vmatpush2.msra.mxu0 0.0
    %336 = vmatprep.mubr.f32.mxu0 0.0
    %337 = vmatmul.mubr.f32.gmra.mxu0 %v261
    %v338 = vpop.f32.mrf.mxu0
    %v339 = vadd.f32 %v242, %v338
    %v340 = vpop.f32.mrf.mxu0
    %341 = vmatprep.mubr.f32.mxu0 0.0
    %342 = vmatmul.mubr.f32.gmra.mxu0 %v264
    %v343 = vpop.f32.mrf.mxu0
    %v344 = vadd.f32 %v247, %v343
    %v345 = vpop.f32.mrf.mxu0
    %346 = vmatprep.mubr.f32.mxu0 0.0
    %347 = vmatmul.mubr.f32.gmra.mxu0 %v267
    %v348 = vpop.f32.mrf.mxu0
    %v349 = vadd.f32 %v252, %v348
    %v350 = vpop.f32.mrf.mxu0
    %351 = vmatprep.mubr.f32.mxu0 0.0
    %352 = vmatmul.mubr.f32.gmra.mxu0 %v270
    %v353 = vpop.f32.mrf.mxu0
    %v354 = vadd.f32 %v257, %v353
    %v355 = vpop.f32.mrf.mxu0
    %356 = vdwg.mxu0
    %v357 = vmax.f32 %v339, 0.0
    %v358 = vmax.f32 %v344, 0.0
    %v359 = vmax.f32 %v349, 0.0
    %v360 = vmax.f32 %v354, 0.0
    %v361 = vld [vmem:[%s5] sm:$0xff]
    %v362 = vld [vmem:[%s5 + $0x8] sm:$0x3]
    %v363 = vld [vmem:[%s6] sm:$0xff]
    %v364 = vld [vmem:[%s6 + $0x8] sm:$0x3]
    %366 = vset.pattern.permute.xlu0 0
    %367 = vperm.xlu0 %366, %v363
    %v368 = vpop.permute.xlu0 %367
    %371 = vset.pattern.permute.xlu0 0
    %372 = vperm.xlu0 %371, %v364
    %v373 = vpop.permute.xlu0 %372
    %v376 = vsel %vm90, %v361, 0
    %v379 = vsel %vm90, %v362, 0
    %381 = vmatprep.subr.mxu0 0.0
    %382 = vmatpush1.msra.mxu0 0.0
    %383 = vmatprep.subr.mxu0 0.0
    %384 = vmatpush1.msra.mxu0 0.0
    %385 = vmatprep.subr.mxu0 0.0
    %386 = vmatpush1.msra.mxu0 0.0
    %387 = vmatprep.subr.mxu0 0.0
    %388 = vmatpush1.msra.mxu0 0.0
    %389 = vmatprep.subr.mxu0 0.0
    %390 = vmatpush1.msra.mxu0 0.0
    %391 = vmatprep.subr.mxu0 0.0
    %392 = vmatpush1.msra.mxu0 0.0
    %393 = vmatprep.subr.mxu0 0.0
    %394 = vmatpush1.msra.mxu0 0.0
    %395 = vmatprep.subr.mxu0 0.0
    %396 = vmatpush1.msra.mxu0 0.0
    %397 = vmatprep.subr.mxu0 0.0
    %398 = vmatpush1.msra.mxu0 0.0
    %399 = vmatprep.subr.mxu0 0.0
    %400 = vmatpush1.msra.mxu0 0.0
    %401 = vmatprep.subr.mxu0 0.0
    %402 = vmatpush1.msra.mxu0 0.0
    %403 = vmatprep.subr.mxu0 0.0
    %404 = vmatpush1.msra.mxu0 0.0
    %405 = vmatprep.subr.mxu0 0.0
    %406 = vmatpush1.msra.mxu0 %v360
    %407 = vmatprep.subr.mxu0 0.0
    %408 = vmatpush1.msra.mxu0 %v359
    %409 = vmatprep.subr.mxu0 0.0
    %410 = vmatpush1.msra.mxu0 %v358
    %411 = vmatprep.subr.mxu0 0.0
    %412 = vmatpush1.msra.mxu0 %v357
    %413 = vmatprep.subr.mxu0 0.0
    %414 = vmatpush2.msra.mxu0 0.0
    %415 = vmatprep.subr.mxu0 0.0
    %416 = vmatpush2.msra.mxu0 0.0
    %417 = vmatprep.subr.mxu0 0.0
    %418 = vmatpush2.msra.mxu0 0.0
    %419 = vmatprep.subr.mxu0 0.0
    %420 = vmatpush2.msra.mxu0 0.0
    %421 = vmatprep.subr.mxu0 0.0
    %422 = vmatpush2.msra.mxu0 0.0
    %423 = vmatprep.subr.mxu0 0.0
    %424 = vmatpush2.msra.mxu0 0.0
    %425 = vmatprep.subr.mxu0 0.0
    %426 = vmatpush2.msra.mxu0 0.0
    %427 = vmatprep.subr.mxu0 0.0
    %428 = vmatpush2.msra.mxu0 0.0
    %429 = vmatprep.subr.mxu0 0.0
    %430 = vmatpush2.msra.mxu0 0.0
    %431 = vmatprep.subr.mxu0 0.0
    %432 = vmatpush2.msra.mxu0 0.0
    %433 = vmatprep.subr.mxu0 0.0
    %434 = vmatpush2.msra.mxu0 0.0
    %435 = vmatprep.subr.mxu0 0.0
    %436 = vmatpush2.msra.mxu0 0.0
    %437 = vmatprep.subr.mxu0 0.0
    %438 = vmatpush2.msra.mxu0 0.0
    %439 = vmatprep.subr.mxu0 0.0
    %440 = vmatpush2.msra.mxu0 0.0
    %441 = vmatprep.subr.mxu0 0.0
    %442 = vmatpush2.msra.mxu0 0.0
    %443 = vmatprep.subr.mxu0 0.0
    %444 = vmatpush2.msra.mxu0 0.0
    %445 = vmatprep.mubr.f32.mxu0 0.0
    %446 = vmatmul.mubr.f32.gmra.mxu0 %v376
    %v447 = vpop.f32.mrf.mxu0
    %v448 = vadd.f32 %v368, %v447
    %v449 = vpop.f32.mrf.mxu0
    %450 = vmatprep.mubr.f32.mxu0 0.0
    %451 = vmatmul.mubr.f32.gmra.mxu0 %v379
    %v452 = vpop.f32.mrf.mxu0
    %v453 = vadd.f32 %v373, %v452
    %v454 = vpop.f32.mrf.mxu0
    %455 = vdwg.mxu0
    %v456 = vmax.f32 %v448, 0.0
    %v457 = vmax.f32 %v453, 0.0
    %v458 = vld [vmem:[%s7] sm:$0x3]
    %v459 = vld [vmem:[%s8] sm:$0x3]
    %461 = vset.pattern.permute.xlu0 0
    %462 = vperm.xlu0 %461, %v459
    %v463 = vpop.permute.xlu0 %462
    %vm465 = vcmask 80896
    %v467 = vsel %vm465, %v458, 0
    %vm469 = vcmask 1041408
    %v471 = vsel %vm469, %v457, 0
    %473 = vmatprep.subr.mxu0 0.0
    %474 = vmatpush1.msra.mxu0 0.0
    %475 = vmatprep.subr.mxu0 0.0
    %476 = vmatpush1.msra.mxu0 0.0
    %477 = vmatprep.subr.mxu0 0.0
    %478 = vmatpush1.msra.mxu0 0.0
    %479 = vmatprep.subr.mxu0 0.0
    %480 = vmatpush1.msra.mxu0 0.0
    %481 = vmatprep.subr.mxu0 0.0
    %482 = vmatpush1.msra.mxu0 0.0
    %483 = vmatprep.subr.mxu0 0.0
    %484 = vmatpush1.msra.mxu0 0.0
    %485 = vmatprep.subr.mxu0 0.0
    %486 = vmatpush1.msra.mxu0 0.0
    %487 = vmatprep.subr.mxu0 0.0
    %488 = vmatpush1.msra.mxu0 0.0
    %489 = vmatprep.subr.mxu0 0.0
    %490 = vmatpush1.msra.mxu0 0.0
    %491 = vmatprep.subr.mxu0 0.0
    %492 = vmatpush1.msra.mxu0 0.0
    %493 = vmatprep.subr.mxu0 0.0
    %494 = vmatpush1.msra.mxu0 0.0
    %495 = vmatprep.subr.mxu0 0.0
    %496 = vmatpush1.msra.mxu0 0.0
    %497 = vmatprep.subr.mxu0 0.0
    %498 = vmatpush1.msra.mxu0 0.0
    %499 = vmatprep.subr.mxu0 0.0
    %500 = vmatpush1.msra.mxu0 0.0
    %501 = vmatprep.subr.mxu0 0.0
    %502 = vmatpush1.msra.mxu0 %v471
    %503 = vmatprep.subr.mxu0 0.0
    %504 = vmatpush1.msra.mxu0 %v456
    %505 = vmatprep.subr.mxu0 0.0
    %506 = vmatpush2.msra.mxu0 0.0
    %507 = vmatprep.subr.mxu0 0.0
    %508 = vmatpush2.msra.mxu0 0.0
    %509 = vmatprep.subr.mxu0 0.0
    %510 = vmatpush2.msra.mxu0 0.0
    %511 = vmatprep.subr.mxu0 0.0
    %512 = vmatpush2.msra.mxu0 0.0
    %513 = vmatprep.subr.mxu0 0.0
    %514 = vmatpush2.msra.mxu0 0.0
    %515 = vmatprep.subr.mxu0 0.0
    %516 = vmatpush2.msra.mxu0 0.0
    %517 = vmatprep.subr.mxu0 0.0
    %518 = vmatpush2.msra.mxu0 0.0
    %519 = vmatprep.subr.mxu0 0.0
    %520 = vmatpush2.msra.mxu0 0.0
    %521 = vmatprep.subr.mxu0 0.0
    %522 = vmatpush2.msra.mxu0 0.0
    %523 = vmatprep.subr.mxu0 0.0
    %524 = vmatpush2.msra.mxu0 0.0
    %525 = vmatprep.subr.mxu0 0.0
    %526 = vmatpush2.msra.mxu0 0.0
    %527 = vmatprep.subr.mxu0 0.0
    %528 = vmatpush2.msra.mxu0 0.0
    %529 = vmatprep.subr.mxu0 0.0
    %530 = vmatpush2.msra.mxu0 0.0
    %531 = vmatprep.subr.mxu0 0.0
    %532 = vmatpush2.msra.mxu0 0.0
    %533 = vmatprep.subr.mxu0 0.0
    %534 = vmatpush2.msra.mxu0 0.0
    %535 = vmatprep.subr.mxu0 0.0
    %536 = vmatpush2.msra.mxu0 0.0
    %537 = vmatprep.mubr.f32.mxu0 0.0
    %538 = vmatmul.mubr.f32.gmra.mxu0 %v467
    %v539 = vpop.f32.mrf.mxu0
    %v540 = vadd.f32 %v463, %v539
    %v541 = vpop.f32.mrf.mxu0
    %542 = vdwg.mxu0
    %vm543 = vcmask 58368
    %544 = vst.msk [vmem:[#allocation2] sm:$0x3] %vm543, %v540
    // Predicated region
    $region38: #{tpu_custom_call.1} parent=1 // pred_check
      _
    $region39: #{tpu_custom_call.1} parent=1 // pred_check_branch
      %546 = sbr.rel (0) target = $region41
    $region40: #{tpu_custom_call.1} parent=1 // pred_region
      %s548 = ssub.s32 32, 32
      %549 = vsyncadd [#allocation3], %s548
      %s551 = sshll.u32 [#allocation2], 4
      %s552 = int_to_ptr.vmem [resolvable:$true] %s551
      %554 = dma.vmem_to_hbm [thread:$0]  %s552, 32, %s9, [#allocation3]
    $region41: #{tpu_custom_call.1} parent=1 // pred_fallthru
      _
    // Predicated region
    $region42: #{tpu_custom_call.1} parent=1 // pred_check
      _
    $region43: #{tpu_custom_call.1} parent=1 // pred_check_branch
      %556 = sbr.rel (0) target = $region45
    $region44: #{tpu_custom_call.1} parent=1 // pred_region
      %557 = dma.done [#allocation3], 32
    $region45: #{tpu_custom_call.1} parent=1 // pred_fallthru
      _
    %558 = vsyncpa [#allocation3], 1

</llo_original>
